<compile_context>
chip_gen: v7x
topology: tpu7x:2x2x1
jax: 0.10.0
libtpu: 0.0.40
codegen_flags: <defaults>
</compile_context>

<pallas_src>
import functools

import jax
import jax.numpy as jnp
from jax.experimental import pallas as pl
from jax.experimental.pallas import tpu as pltpu


def _round_up(x, m):
    return ((x + m - 1) // m) * m


def backbone_kernel(x_ref, wc_ref, bc_ref, feat_ref, *, hw, tile_hw, inv_hw):
    """One (batch, pixel-tile) grid step of 1x1-conv + ReLU + GAP accumulation.

    x_ref   : [1, TILE_HW, C_pad]  pixel tile (channels zero-padded to C_pad)
    wc_ref  : [C_pad, F]           1x1-conv weight (rows >= C are zero)
    bc_ref  : [1, F]               1x1-conv bias
    feat_ref: [1, 1, F]            per-image accumulator / pooled features out
    """
    t = pl.program_id(1)

    x = x_ref[0]                                            # [TILE_HW, C_pad]
    fmap = jnp.dot(x, wc_ref[...], preferred_element_type=jnp.float32)
    fmap = jnp.maximum(fmap + bc_ref[...], 0.0)             # [TILE_HW, F]

    if hw % tile_hw != 0:
        # Zero out padded pixel rows (they would otherwise contribute ReLU(b)).
        rows = jax.lax.broadcasted_iota(jnp.int32, fmap.shape, 0)
        valid = (t * tile_hw + rows) < hw
        fmap = jnp.where(valid, fmap, 0.0)

    partial = jnp.sum(fmap, axis=0, keepdims=True)          # [1, F]

    @pl.when(t == 0)
    def _():
        feat_ref[0] = partial

    @pl.when(t > 0)
    def _():
        feat_ref[0] = feat_ref[0] + partial

    @pl.when(t == pl.num_programs(1) - 1)
    def _():
        feat_ref[0] = feat_ref[0] * inv_hw                  # sum -> mean


def classifier_kernel(f_ref, w1_ref, b1_ref, w2_ref, b2_ref, w3_ref, b3_ref,
                      out_ref):
    """Linear -> ReLU -> Linear -> ReLU -> Linear on [B, F] features.

    w3/b3/out are lane-padded to 128 columns (zeros); wrapper slices to 63.
    """
    h = jnp.dot(f_ref[...], w1_ref[...], preferred_element_type=jnp.float32)
    h = jnp.maximum(h + b1_ref[...], 0.0)
    h = jnp.dot(h, w2_ref[...], preferred_element_type=jnp.float32)
    h = jnp.maximum(h + b2_ref[...], 0.0)
    out_ref[...] = (jnp.dot(h, w3_ref[...], preferred_element_type=jnp.float32)
                    + b3_ref[...])


def init_params(key, in_channels, expansion=1, joint_nb=21,
                hidden_neurons=1024, coord_dim=3):
    """Deterministic PyTorch-Linear-style init (uniform +/- 1/sqrt(fan_in))."""
    feat_dim = 512 * expansion
    if expansion == 4:
        interm_hidden = 1024
    elif expansion == 1:
        interm_hidden = 512
    else:
        raise ValueError("expansion must be 1 or 4")
    out_dim = joint_nb * coord_dim

    dims = [
        ("wc", "bc", in_channels, feat_dim),
        ("w1", "b1", feat_dim, interm_hidden),
        ("w2", "b2", interm_hidden, hidden_neurons),
        ("w3", "b3", hidden_neurons, out_dim),
    ]
    params = {}
    keys = jax.random.split(key, 2 * len(dims))
    for i, (wn, bn, fan_in, fan_out) in enumerate(dims):
        bound = 1.0 / jnp.sqrt(jnp.float32(fan_in))
        params[wn] = jax.random.uniform(
            keys[2 * i], (fan_in, fan_out), jnp.float32, -bound, bound)
        params[bn] = jax.random.uniform(
            keys[2 * i + 1], (1, fan_out), jnp.float32, -bound, bound)
    return params


def hand_reg_net(x_nchw, params, joint_nb=21, coord_dim=3, tile_hw=None):
    """Forward pass. x_nchw: [B, C, H, W] float32. Returns {'joints': [B, J, 3]}."""
    B, C, H, W = x_nchw.shape
    hw = H * W
    out_dim = joint_nb * coord_dim
    feat_dim = params["wc"].shape[1]

    # ---- layout / padding choices ----
    c_pad = max(8, _round_up(C, 8))               # K >= 8 for sublane alignment
    if tile_hw is None:
        tile_hw = min(_round_up(hw, 8), 1024)     # ~2 MiB fmap tile @ F=512
    tile_hw = max(8, _round_up(tile_hw, 8))
    hw_pad = _round_up(hw, tile_hw)
    n_tiles = hw_pad // tile_hw
    out_pad = 128                                 # lane-dense classifier output

    # NCHW -> [B, HW, C], zero-pad pixel rows + channels (glue, plain JAX).
    x_pix = jnp.transpose(x_nchw, (0, 2, 3, 1)).reshape(B, hw, C)
    x_pix = jnp.pad(x_pix, ((0, 0), (0, hw_pad - hw), (0, c_pad - C)))

    wc = jnp.pad(params["wc"], ((0, c_pad - C), (0, 0)))     # [C_pad, F]
    bc = params["bc"]                                        # [1, F]
    w3 = jnp.pad(params["w3"], ((0, 0), (0, out_pad - out_dim)))
    b3 = jnp.pad(params["b3"], ((0, 0), (0, out_pad - out_dim)))

    # ---- Kernel 1: streaming backbone (1x1 conv + ReLU + GAP) ----
    backbone = functools.partial(backbone_kernel, hw=hw, tile_hw=tile_hw,
                                 inv_hw=1.0 / float(hw))
    feats = pl.pallas_call(
        backbone,
        out_shape=jax.ShapeDtypeStruct((B, 1, feat_dim), jnp.float32),
        grid=(B, n_tiles),
        in_specs=[
            pl.BlockSpec((1, tile_hw, c_pad), lambda b, t: (b, t, 0)),  # x tile
            pl.BlockSpec((c_pad, feat_dim), lambda b, t: (0, 0)),       # wc (resident)
            pl.BlockSpec((1, feat_dim), lambda b, t: (0, 0)),           # bc (resident)
        ],
        out_specs=pl.BlockSpec((1, 1, feat_dim), lambda b, t: (b, 0, 0)),
        compiler_params=pltpu.CompilerParams(
            dimension_semantics=("parallel", "arbitrary"),
            vmem_limit_bytes=32 * 1024 * 1024),
    )(x_pix, wc, bc)
    feats = feats.reshape(B, feat_dim)

    # ---- Kernel 2: classifier MLP (tiny, single invocation) ----
    vmem = pl.BlockSpec(memory_space=pltpu.MemorySpace.VMEM)
    joints_pad = pl.pallas_call(
        classifier_kernel,
        out_shape=jax.ShapeDtypeStruct((B, out_pad), jnp.float32),
        in_specs=[vmem] * 7,
        out_specs=vmem,
        compiler_params=pltpu.CompilerParams(
            vmem_limit_bytes=32 * 1024 * 1024),
    )(feats, params["w1"], params["b1"], params["w2"], params["b2"], w3, b3)

    # Slice padded lanes back to joint_nb*coord_dim, then view as [B, J, 3].
    joints = joints_pad[:, :out_dim].reshape(B, joint_nb, coord_dim)
    return {"joints": joints}


if __name__ == "__main__":
    key = jax.random.PRNGKey(0)
    k_x, k_p = jax.random.split(key)

    # Small, module-consistent shapes: batch=2, 4 input channels, 16x16 spatial,
    # expansion=1 backbone (features dim 512), joint_nb=21, coord_dim=3.
    B, C, H, W = 2, 4, 16, 16
    x = jax.random.normal(k_x, (B, C, H, W), jnp.float32)
    params = init_params(k_p, in_channels=C, expansion=1,
                         joint_nb=21, hidden_neurons=1024, coord_dim=3)

    # tile_hw=64 forces a multi-tile (B=2 x 4-tile) grid so the streaming
    # GAP accumulation path is exercised even at this toy spatial size.
    out = hand_reg_net(x, params, tile_hw=64)
    joints = jax.block_until_ready(out["joints"])
    assert joints.shape == (B, 21, 3), joints.shape
    assert joints.dtype == jnp.float32

    # Pure-JAX reference check of the same math.
    x_pix = jnp.transpose(x, (0, 2, 3, 1)).reshape(B * H * W, C)
    fmap = jnp.maximum(x_pix @ params["wc"] + params["bc"], 0.0)
    feats = fmap.reshape(B, H * W, -1).mean(axis=1)
    h1 = jnp.maximum(feats @ params["w1"] + params["b1"], 0.0)
    h2 = jnp.maximum(h1 @ params["w2"] + params["b2"], 0.0)
    ref = (h2 @ params["w3"] + params["b3"]).reshape(B, 21, 3)
    assert jnp.allclose(joints, ref, atol=1e-4, rtol=1e-4)

    print("KERNEL_OK")
</pallas_src>

<mosaic_0001>
module attributes {stable_mosaic.version = 11 : i64} {
  func.func @backbone_kernel(%arg0: i32, %arg1: i32, %arg2: memref<1x64x8xf32, #tpu.memory_space<vmem>>, %arg3: memref<8x512xf32, #tpu.memory_space<vmem>>, %arg4: memref<1x512xf32, #tpu.memory_space<vmem>>, %arg5: memref<1x1x512xf32, #tpu.memory_space<vmem>>) attributes {dimension_semantics = [#tpu.dimension_semantics<parallel>, #tpu.dimension_semantics<arbitrary>], iteration_bounds = array<i64: 2, 4>, scalar_prefetch = 0 : i64, scratch_operands = 0 : i64, tpu.core_type = #tpu.core_type<tc>, window_params = [{transform_indices = @transform_0, window_bounds = array<i64: 1, 64, 8>}, {pipeline_mode = #tpu.pipeline_mode<synchronous>, transform_indices = @transform_1, window_bounds = array<i64: 8, 512>}, {pipeline_mode = #tpu.pipeline_mode<synchronous>, transform_indices = @transform_2, window_bounds = array<i64: 1, 512>}, {transform_indices = @transform_3, window_bounds = array<i64: 1, 1, 512>}]} {
    %c0 = arith.constant 0 : index
    %c0_0 = arith.constant 0 : index
    %c0_1 = arith.constant 0 : index
    %0 = vector.load %arg2[%c0, %c0_0, %c0_1] : memref<1x64x8xf32, #tpu.memory_space<vmem>>, vector<1x64x8xf32>
    %1 = vector.shape_cast %0 : vector<1x64x8xf32> to vector<64x8xf32>
    %c0_2 = arith.constant 0 : index
    %c0_3 = arith.constant 0 : index
    %2 = vector.load %arg3[%c0_2, %c0_3] : memref<8x512xf32, #tpu.memory_space<vmem>>, vector<8x512xf32>
    %cst = arith.constant dense<0.000000e+00> : vector<64x512xf32>
    %3 = tpu.matmul %1, %2, %cst {dimension_numbers = #tpu.dot_dimension_numbers<[1], [0], [0], [1], [0, 0, 1, 1], [], []>} : vector<64x8xf32>, vector<8x512xf32>, vector<64x512xf32> -> vector<64x512xf32>
    %c0_4 = arith.constant 0 : index
    %c0_5 = arith.constant 0 : index
    %4 = vector.load %arg4[%c0_4, %c0_5] : memref<1x512xf32, #tpu.memory_space<vmem>>, vector<1x512xf32>
    %5 = vector.broadcast %4 : vector<1x512xf32> to vector<64x512xf32>
    %6 = arith.addf %3, %5 : vector<64x512xf32>
    %cst_6 = arith.constant 0.000000e+00 : f32
    %7 = vector.broadcast %cst_6 : f32 to vector<64x512xf32>
    %8 = arith.maximumf %6, %7 : vector<64x512xf32>
    %cst_7 = arith.constant dense<0.000000e+00> : vector<512xf32>
    %9 = vector.multi_reduction <add>, %8, %cst_7 [0] : vector<64x512xf32> to vector<512xf32>
    %10 = vector.shape_cast %9 : vector<512xf32> to vector<1x512xf32>
    %c0_i32 = arith.constant 0 : i32
    %11 = arith.cmpi eq, %arg1, %c0_i32 : i32
    %12 = arith.extui %11 : i1 to i32
    %c0_i32_8 = arith.constant 0 : i32
    %13 = arith.cmpi ne, %12, %c0_i32_8 : i32
    scf.if %13 {
      %c0_12 = arith.constant 0 : index
      %c0_13 = arith.constant 0 : index
      %c0_14 = arith.constant 0 : index
      %20 = vector.load %arg5[%c0_12, %c0_13, %c0_14] : memref<1x1x512xf32, #tpu.memory_space<vmem>>, vector<1x1x512xf32>
      %21 = vector.shape_cast %20 : vector<1x1x512xf32> to vector<1x512xf32>
      %22 = vector.shape_cast %10 : vector<1x512xf32> to vector<1x1x512xf32>
      tpu.vector_store %arg5[%c0_12, %c0_13, %c0_14], %22 {strides = array<i32>} : memref<1x1x512xf32, #tpu.memory_space<vmem>>, vector<1x1x512xf32>,
    } else {
    }
    %c0_i32_9 = arith.constant 0 : i32
    %14 = arith.cmpi sgt, %arg1, %c0_i32_9 : i32
    %15 = arith.extui %14 : i1 to i32
    %c0_i32_10 = arith.constant 0 : i32
    %16 = arith.cmpi ne, %15, %c0_i32_10 : i32
    scf.if %16 {
      %c0_12 = arith.constant 0 : index
      %c0_13 = arith.constant 0 : index
      %c0_14 = arith.constant 0 : index
      %20 = vector.load %arg5[%c0_12, %c0_13, %c0_14] : memref<1x1x512xf32, #tpu.memory_space<vmem>>, vector<1x1x512xf32>
      %21 = vector.shape_cast %20 : vector<1x1x512xf32> to vector<1x512xf32>
      %22 = arith.addf %21, %10 : vector<1x512xf32>
      %c0_15 = arith.constant 0 : index
      %c0_16 = arith.constant 0 : index
      %c0_17 = arith.constant 0 : index
      %23 = vector.load %arg5[%c0_15, %c0_16, %c0_17] : memref<1x1x512xf32, #tpu.memory_space<vmem>>, vector<1x1x512xf32>
      %24 = vector.shape_cast %23 : vector<1x1x512xf32> to vector<1x512xf32>
      %25 = vector.shape_cast %22 : vector<1x512xf32> to vector<1x1x512xf32>
      tpu.vector_store %arg5[%c0_15, %c0_16, %c0_17], %25 {strides = array<i32>} : memref<1x1x512xf32, #tpu.memory_space<vmem>>, vector<1x1x512xf32>,
    } else {
    }
    %c3_i32 = arith.constant 3 : i32
    %17 = arith.cmpi eq, %arg1, %c3_i32 : i32
    %18 = arith.extui %17 : i1 to i32
    %c0_i32_11 = arith.constant 0 : i32
    %19 = arith.cmpi ne, %18, %c0_i32_11 : i32
    scf.if %19 {
      %c0_12 = arith.constant 0 : index
      %c0_13 = arith.constant 0 : index
      %c0_14 = arith.constant 0 : index
      %20 = vector.load %arg5[%c0_12, %c0_13, %c0_14] : memref<1x1x512xf32, #tpu.memory_space<vmem>>, vector<1x1x512xf32>
      %21 = vector.shape_cast %20 : vector<1x1x512xf32> to vector<1x512xf32>
      %cst_15 = arith.constant 3.906250e-03 : f32
      %22 = vector.broadcast %cst_15 : f32 to vector<1x512xf32>
      %23 = arith.mulf %21, %22 : vector<1x512xf32>
      %c0_16 = arith.constant 0 : index
      %c0_17 = arith.constant 0 : index
      %c0_18 = arith.constant 0 : index
      %24 = vector.load %arg5[%c0_16, %c0_17, %c0_18] : memref<1x1x512xf32, #tpu.memory_space<vmem>>, vector<1x1x512xf32>
      %25 = vector.shape_cast %24 : vector<1x1x512xf32> to vector<1x512xf32>
      %26 = vector.shape_cast %23 : vector<1x512xf32> to vector<1x1x512xf32>
      tpu.vector_store %arg5[%c0_16, %c0_17, %c0_18], %26 {strides = array<i32>} : memref<1x1x512xf32, #tpu.memory_space<vmem>>, vector<1x1x512xf32>,
    } else {
    }
    return
  }
  func.func @transform_0(%arg0: i32, %arg1: i32) -> (i32, i32, i32) {
    %c0_i32 = arith.constant 0 : i32
    %c0_i32_0 = arith.constant 0 : i32
    return %arg0, %arg1, %c0_i32 : i32, i32, i32
  }
  func.func @transform_1(%arg0: i32, %arg1: i32) -> (i32, i32) {
    %c0_i32 = arith.constant 0 : i32
    %c0_i32_0 = arith.constant 0 : i32
    %c0_i32_1 = arith.constant 0 : i32
    return %c0_i32, %c0_i32_0 : i32, i32
  }
  func.func @transform_2(%arg0: i32, %arg1: i32) -> (i32, i32) {
    %c0_i32 = arith.constant 0 : i32
    %c0_i32_0 = arith.constant 0 : i32
    %c0_i32_1 = arith.constant 0 : i32
    return %c0_i32, %c0_i32_0 : i32, i32
  }
  func.func @transform_3(%arg0: i32, %arg1: i32) -> (i32, i32, i32) {
    %c0_i32 = arith.constant 0 : i32
    %c0_i32_0 = arith.constant 0 : i32
    %c0_i32_1 = arith.constant 0 : i32
    return %arg0, %c0_i32, %c0_i32_0 : i32, i32, i32
  }
}

</mosaic_0001>

<llo_original>
// kernel: tpu_custom_call.1
$region0: #{tpu_custom_call.1}
  #allocation0 [shape = 'u32[]', space=smem, size = 0x4, offset = 0x4, fixed_abs, tag = 'smem constant byte address 0x4 - core index']
  #allocation1 [shape = 'u32[144,128]{1,0:T(1,128)}', space=vmem, size = 0x12000, scoped, tag = 'internal scratch']
  %s0 = inlined_call_operand.vmem [shape: f32[2,256,8], index: 0, kind: input, shape index: {}]
  %s1 = inlined_call_operand.vmem [shape: f32[8,512], index: 1, kind: input, shape index: {}]
  %s2 = inlined_call_operand.vmem [shape: f32[1,512], index: 2, kind: input, shape index: {}]
  %s3 = inlined_call_operand.hbm [shape: f32[2,1,512], index: 3, kind: output, shape index: {}]
  %s4 = sld [smem:[#allocation0]]
  $region57: #{tpu_custom_call.1} parent=0
    _
  %s6 = ssub.s32 1, %s4
  %s7 = scalar_select 0, %s6, %s4
  $region1: #{tpu_custom_call.1} parent=0
    #allocation2 [shape = 'u8[4096]{0}', space=vmem, size = 0x1000, scoped, tag = 'output window, operand 0']
    #allocation3 [shape = 's32[2]{0}', space=sflag, size = 0x8, scoped, tag = 'scoped memory for tpu_custom_call.1']
    %8 = vsyncpa [#allocation3], 0
    %s9 = scalar_lea.sflag [#allocation3], 1
    %10 = vsyncpa %s9, 0
    loop: start=0, step=1, limit=10
    $region2: #{tpu_custom_call.1} parent=1 // loop_pre_header
      _
    $region3: #{tpu_custom_call.1} parent=1 // loop_header
      %s12 = sphi 0, %s16
      %p13 = scmp.ge.s32.totalorder %s12, 10
      %s19 = sphi 0, %s31
      %s20 = sphi 0, %s27
      %s21 = sphi 0, %s19
      %s22 = sphi 0, %s20
      %s23 = sphi 0, %s21
      %s24 = sphi 0, %s22
      %s36 = sphi 0, %s38
      %s39 = sphi 0, %s36
      %s40 = sphi 0, %s39
      %s56 = sphi 0, %s40
      %s60 = sphi 0, %s60
      %s62 = sphi 0, %s60
      %s63 = sphi 0, %s62
      %s77 = sphi 0, %s63
      %s81 = sphi 0, %s81
      %s83 = sphi 0, %s81
      %s84 = sphi 0, %s83
      %s98 = sphi 0, %s84
      %s104 = sphi 0, %s106
      %s107 = sphi 0, %s104
      %s108 = sphi 0, %s107
      %s124 = sphi 0, %s108
    $region4: #{tpu_custom_call.1} parent=1 // loop_header_branch
      %15 = sbr.rel (%p13) target = $region8
    $region5: #{tpu_custom_call.1} parent=1 // loop_body
      %s17 = ssub.s32 %s12, 1
      %s18 = ssub.s32 %s12, 2
      %s25 = sadd.s32 1, %s20
      %p26 = scmp.ge.s32.totalorder %s25, 4
      %s27 = scalar_select %p26, 0, %s25
      %s28 = sadd.s32 1, %s19
      %s29 = scalar_select %p26, %s28, %s19
      %p30 = scmp.ge.s32.totalorder %s29, 2
      %s31 = scalar_select %p30, 0, %s29
      %s32 = ssub.s32 %s19, %s31
      %s33 = ssub.s32 %s20, %s27
      %s34 = sor.u32 %s32, %s33
      %p35 = scmp.eq.s32.totalorder %s34, 0
      %s37 = sadd.s32 %s36, 1
      %s38 = scalar_select %p35, %s36, %s37
      %p41 = pneg %p35
      %p42 = scmp.eq.s32.totalorder %s12, 7
      %p43 = por %p41, %p42
      %p44 = scmp.ne.s32.totalorder %s36, %s39
      %p45 = scmp.eq.s32.totalorder %s12, 0
      %p46 = por %p44, %p45
      %p47 = scmp.ne.s32.totalorder %s36, %s39
      %p48 = scmp.eq.s32.totalorder %s17, 7
      %p49 = por %p47, %p48
      %p50 = scmp.ne.s32.totalorder %s39, %s40
      %p51 = scmp.eq.s32.totalorder %s17, 0
      %p52 = por %p50, %p51
      %p53 = scmp.ne.s32.totalorder %s39, %s40
      %p54 = scmp.eq.s32.totalorder %s18, 7
      %p55 = por %p53, %p54
      %p57 = scmp.ne.s32.totalorder %s40, %s56
      %p58 = scmp.eq.s32.totalorder %s18, 0
      %p59 = por %p57, %p58
      %s61 = sadd.s32 %s60, 1
      %p64 = scmp.eq.s32.totalorder %s12, 7
      %p65 = scmp.ne.s32.totalorder %s60, %s62
      %p66 = scmp.eq.s32.totalorder %s12, 0
      %p67 = por %p65, %p66
      %p68 = scmp.ne.s32.totalorder %s60, %s62
      %p69 = scmp.eq.s32.totalorder %s17, 7
      %p70 = por %p68, %p69
      %p71 = scmp.ne.s32.totalorder %s62, %s63
      %p72 = scmp.eq.s32.totalorder %s17, 0
      %p73 = por %p71, %p72
      %p74 = scmp.ne.s32.totalorder %s62, %s63
      %p75 = scmp.eq.s32.totalorder %s18, 7
      %p76 = por %p74, %p75
      %p78 = scmp.ne.s32.totalorder %s63, %s77
      %p79 = scmp.eq.s32.totalorder %s18, 0
      %p80 = por %p78, %p79
      %s82 = sadd.s32 %s81, 1
      %p85 = scmp.eq.s32.totalorder %s12, 7
      %p86 = scmp.ne.s32.totalorder %s81, %s83
      %p87 = scmp.eq.s32.totalorder %s12, 0
      %p88 = por %p86, %p87
      %p89 = scmp.ne.s32.totalorder %s81, %s83
      %p90 = scmp.eq.s32.totalorder %s17, 7
      %p91 = por %p89, %p90
      %p92 = scmp.ne.s32.totalorder %s83, %s84
      %p93 = scmp.eq.s32.totalorder %s17, 0
      %p94 = por %p92, %p93
      %p95 = scmp.ne.s32.totalorder %s83, %s84
      %p96 = scmp.eq.s32.totalorder %s18, 7
      %p97 = por %p95, %p96
      %p99 = scmp.ne.s32.totalorder %s84, %s98
      %p100 = scmp.eq.s32.totalorder %s18, 0
      %p101 = por %p99, %p100
      %s102 = ssub.s32 %s19, %s31
      %p103 = scmp.eq.s32.totalorder %s102, 0
      %s105 = sadd.s32 %s104, 1
      %s106 = scalar_select %p103, %s104, %s105
      %p109 = pneg %p103
      %p110 = scmp.eq.s32.totalorder %s12, 7
      %p111 = por %p109, %p110
      %p112 = scmp.ne.s32.totalorder %s104, %s107
      %p113 = scmp.eq.s32.totalorder %s12, 0
      %p114 = por %p112, %p113
      %p115 = scmp.ne.s32.totalorder %s104, %s107
      %p116 = scmp.eq.s32.totalorder %s17, 7
      %p117 = por %p115, %p116
      %p118 = scmp.ne.s32.totalorder %s107, %s108
      %p119 = scmp.eq.s32.totalorder %s17, 0
      %p120 = por %p118, %p119
      %p121 = scmp.ne.s32.totalorder %s107, %s108
      %p122 = scmp.eq.s32.totalorder %s18, 7
      %p123 = por %p121, %p122
      %p125 = scmp.ne.s32.totalorder %s108, %s124
      %p126 = scmp.eq.s32.totalorder %s18, 0
      %p127 = por %p125, %p126
      %p128 = scmp.le.s32.totalorder 1, %s12
      %p129 = scmp.lt.s32.totalorder %s12, 9
      %p130 = pnand %p128, %p129
      %p131 = pneg %p130
      // Predicated region
      $region9: #{tpu_custom_call.1} parent=5 // pred_check
        _
      $region10: #{tpu_custom_call.1} parent=5 // pred_check_branch
        %133 = sbr.rel (%p130) target = $region12
      $region11: #{tpu_custom_call.1} parent=5 // pred_region
        %s134 = ssub.s32 %s12, 1
        // Predicated region
        $region13: #{tpu_custom_call.1} parent=11 // pred_check
          %p135 = pneg %p73
        $region14: #{tpu_custom_call.1} parent=11 // pred_check_branch
          %137 = sbr.rel (%p135) target = $region16
        $region15: #{tpu_custom_call.1} parent=11 // pred_region
          _
        $region16: #{tpu_custom_call.1} parent=11 // pred_fallthru
          _
        // Predicated region
        $region17: #{tpu_custom_call.1} parent=11 // pred_check
          %p138 = pneg %p94
        $region18: #{tpu_custom_call.1} parent=11 // pred_check_branch
          %140 = sbr.rel (%p138) target = $region20
        $region19: #{tpu_custom_call.1} parent=11 // pred_region
          _
        $region20: #{tpu_custom_call.1} parent=11 // pred_fallthru
          _
      $region12: #{tpu_custom_call.1} parent=5 // pred_fallthru
        _
      %p141 = scmp.lt.s32.totalorder %s12, 8
      // Predicated region
      $region21: #{tpu_custom_call.1} parent=5 // pred_check
        %p142 = pneg %p141
      $region22: #{tpu_custom_call.1} parent=5 // pred_check_branch
        %144 = sbr.rel (%p142) target = $region24
      $region23: #{tpu_custom_call.1} parent=5 // pred_region
        // Predicated region
        $region25: #{tpu_custom_call.1} parent=23 // pred_check
          %p145 = pneg %p46
        $region26: #{tpu_custom_call.1} parent=23 // pred_check_branch
          %147 = sbr.rel (%p145) target = $region28
        $region27: #{tpu_custom_call.1} parent=23 // pred_region
          %s148 = smul.u32 8, %s20
          %p149 = scmp.lt.s32.totalorder %s19, 1
          %s150 = scalar_select %p149, %s19, 1
          %p151 = scmp.lt.s32.totalorder %s148, 31
          %s152 = scalar_select %p151, %s148, 31
          %s153 = smul.addr %s150, 32
          %s154 = sadd.s32 %s152, %s153
          %s155 = smul.addr %s154, 8
          %s156 = scalar_lea.vmem %s0, %s155
          %s157 = smul.u32 8, %s20
        $region28: #{tpu_custom_call.1} parent=23 // pred_fallthru
          _
      $region24: #{tpu_custom_call.1} parent=5 // pred_fallthru
        _
      %p158 = scmp.le.s32.totalorder 1, %s12
      %p159 = scmp.lt.s32.totalorder %s12, 9
      %p160 = pnand %p158, %p159
      %p161 = pneg %p160
      // Predicated region
      $region29: #{tpu_custom_call.1} parent=5 // pred_check
        _
      $region30: #{tpu_custom_call.1} parent=5 // pred_check_branch
        %163 = sbr.rel (%p160) target = $region32
      $region31: #{tpu_custom_call.1} parent=5 // pred_region
        %s164 = ssub.s32 %s12, 1
        %s165 = smul.u32 8, %s22
        %p166 = scmp.lt.s32.totalorder %s21, 1
        %s167 = scalar_select %p166, %s21, 1
        %p168 = scmp.lt.s32.totalorder %s165, 31
        %s169 = scalar_select %p168, %s165, 31
        %s170 = smul.addr %s167, 32
        %s171 = sadd.s32 %s169, %s170
        %s172 = smul.addr %s171, 8
        %s173 = scalar_lea.vmem %s0, %s172
        %p174 = pneg %p52
        %p175 = pneg %p49
        %p176 = pneg %p73
        %p177 = pneg %p70
        %p178 = pneg %p94
        %p179 = pneg %p91
        %p180 = pneg %p120
        %p181 = pneg %p117
        %s182 = sand.u32 %s107, 1
        %s183 = scalar_lea.sflag [#allocation3], %s182
        %s184 = sand.u32 %s107, 1
        %s185 = smul.addr %s184, 4
        %s186 = scalar_lea.vmem [#allocation2], %s185
        %s187 = smul.u32 8, %s22
        %p188 = scmp.lt.s32.totalorder %s21, 1
        %s189 = scalar_select %p188, %s21, 1
        %p190 = scmp.lt.s32.totalorder %s187, 31
        %s191 = scalar_select %p190, %s187, 31
        %s192 = smul.addr %s189, 32
        %s193 = sadd.s32 %s191, %s192
        %s194 = smul.addr %s193, 8
        %s195 = scalar_lea.vmem %s0, %s194
        %s196 = smul.u32 8, %s22
        %v197 = vld [vmem:[%s195] sm:$0xff]
        %v198 = vld [vmem:[%s195 + $0x8] sm:$0xff]
        %v199 = vld [vmem:[%s195 + $0x10] sm:$0xff]
        %v200 = vld [vmem:[%s195 + $0x18] sm:$0xff]
        %v201 = vld [vmem:[%s195 + $0x20] sm:$0xff]
        %v202 = vld [vmem:[%s195 + $0x28] sm:$0xff]
        %v203 = vld [vmem:[%s195 + $0x30] sm:$0xff]
        %v204 = vld [vmem:[%s195 + $0x38] sm:$0xff]
        %v205 = vld [vmem:[%s1] sm:$0xff]
        %v206 = vld [vmem:[%s1 + $0x8] sm:$0xff]
        %v207 = vld [vmem:[%s1 + $0x10] sm:$0xff]
        %v208 = vld [vmem:[%s1 + $0x18] sm:$0xff]
        %v209 = vld [vmem:[%s2] sm:$0xf]
        %v211 = vlaneseq
        %v212 = vshrl.u32 %v211, 7
        %v213 = vsub.s32 0, %v212
        %v214 = vrot.slane %v209, %v213
        %v215 = vlaneseq
        %v216 = vshrl.u32 %v215, 7
        %v217 = vsub.s32 1, %v216
        %v218 = vrot.slane %v209, %v217
        %v219 = vlaneseq
        %v220 = vshrl.u32 %v219, 7
        %v221 = vsub.s32 2, %v220
        %v222 = vrot.slane %v209, %v221
        %v223 = vlaneseq
        %v224 = vshrl.u32 %v223, 7
        %v225 = vsub.s32 3, %v224
        %v226 = vrot.slane %v209, %v225
        %vm231 = vcmask 64512
        %v233 = vsel %vm231, %v197, 0
        %v236 = vsel %vm231, %v198, 0
        %v239 = vsel %vm231, %v199, 0
        %v242 = vsel %vm231, %v200, 0
        %v245 = vsel %vm231, %v201, 0
        %v248 = vsel %vm231, %v202, 0
        %v251 = vsel %vm231, %v203, 0
        %v254 = vsel %vm231, %v204, 0
        %256 = vmatprep.subr.mxu0 %v206
        %257 = vmatpush1.msra.mxu0 %v205
        %258 = vmatprep.subr.mxu0 0.0
        %259 = vmatpush1.msra.mxu0 0.0
        %260 = vmatprep.subr.mxu0 0.0
        %261 = vmatpush1.msra.mxu0 0.0
        %262 = vmatprep.subr.mxu0 0.0
        %263 = vmatpush1.msra.mxu0 0.0
        %264 = vmatprep.subr.mxu0 0.0
        %265 = vmatpush1.msra.mxu0 0.0
        %266 = vmatprep.subr.mxu0 0.0
        %267 = vmatpush1.msra.mxu0 0.0
        %268 = vmatprep.subr.mxu0 0.0
        %269 = vmatpush1.msra.mxu0 0.0
        %270 = vmatprep.subr.mxu0 0.0
        %271 = vmatpush1.msra.mxu0 0.0
        %272 = vmatprep.subr.mxu0 0.0
        %273 = vmatpush1.msra.mxu0 0.0
        %274 = vmatprep.subr.mxu0 0.0
        %275 = vmatpush1.msra.mxu0 0.0
        %276 = vmatprep.subr.mxu0 0.0
        %277 = vmatpush1.msra.mxu0 0.0
        %278 = vmatprep.subr.mxu0 0.0
        %279 = vmatpush1.msra.mxu0 0.0
        %280 = vmatprep.subr.mxu0 0.0
        %281 = vmatpush1.msra.mxu0 0.0
        %282 = vmatprep.subr.mxu0 0.0
        %283 = vmatpush1.msra.mxu0 0.0
        %284 = vmatprep.subr.mxu0 0.0
        %285 = vmatpush1.msra.mxu0 0.0
        %286 = vmatprep.subr.mxu0 0.0
        %287 = vmatpush1.msra.mxu0 0.0
        %288 = vmatprep.subr.mxu0 0.0
        %289 = vmatpush1.msra.mxu0 0.0
        %290 = vmatprep.subr.mxu0 0.0
        %291 = vmatpush1.msra.mxu0 0.0
        %292 = vmatprep.subr.mxu0 0.0
        %293 = vmatpush1.msra.mxu0 0.0
        %294 = vmatprep.subr.mxu0 0.0
        %295 = vmatpush1.msra.mxu0 0.0
        %296 = vmatprep.subr.mxu0 0.0
        %297 = vmatpush1.msra.mxu0 0.0
        %298 = vmatprep.subr.mxu0 0.0
        %299 = vmatpush1.msra.mxu0 0.0
        %300 = vmatprep.subr.mxu0 0.0
        %301 = vmatpush1.msra.mxu0 0.0
        %302 = vmatprep.subr.mxu0 0.0
        %303 = vmatpush1.msra.mxu0 0.0
        %304 = vmatprep.subr.mxu0 0.0
        %305 = vmatpush1.msra.mxu0 0.0
        %306 = vmatprep.subr.mxu0 0.0
        %307 = vmatpush1.msra.mxu0 0.0
        %308 = vmatprep.subr.mxu0 0.0
        %309 = vmatpush1.msra.mxu0 0.0
        %310 = vmatprep.subr.mxu0 0.0
        %311 = vmatpush1.msra.mxu0 0.0
        %312 = vmatprep.subr.mxu0 0.0
        %313 = vmatpush1.msra.mxu0 0.0
        %314 = vmatprep.subr.mxu0 0.0
        %315 = vmatpush1.msra.mxu0 0.0
        %316 = vmatprep.subr.mxu0 0.0
        %317 = vmatpush1.msra.mxu0 0.0
        %318 = vmatprep.subr.mxu0 0.0
        %319 = vmatpush1.msra.mxu0 0.0
        %320 = vmatprep.mubr.f32.mxu0 0.0
        %321 = vmatmul.mubr.f32.gmra.mrb[0].mxu0 %v233
        %v322 = vpop.f32.mrb[0].mxu0
        %v323 = vadd.f32 %v214, %v322
        %v324 = vpop.f32.mrb[0].mxu0
        %v325 = vadd.f32 %v218, %v324
        %326 = vmatprep.mubr.f32.mxu0 0.0
        %327 = vmatmul.mubr.f32.gmra.mrb[0].mxu0 %v236
        %v328 = vpop.f32.mrb[0].mxu0
        %v329 = vadd.f32 %v214, %v328
        %v330 = vpop.f32.mrb[0].mxu0
        %v331 = vadd.f32 %v218, %v330
        %332 = vmatprep.mubr.f32.mxu0 0.0
        %333 = vmatmul.mubr.f32.gmra.mrb[0].mxu0 %v239
        %v334 = vpop.f32.mrb[0].mxu0
        %v335 = vadd.f32 %v214, %v334
        %v336 = vpop.f32.mrb[0].mxu0
        %v337 = vadd.f32 %v218, %v336
        %338 = vmatprep.mubr.f32.mxu0 0.0
        %339 = vmatmul.mubr.f32.gmra.mrb[0].mxu0 %v242
        %v340 = vpop.f32.mrb[0].mxu0
        %v341 = vadd.f32 %v214, %v340
        %v342 = vpop.f32.mrb[0].mxu0
        %v343 = vadd.f32 %v218, %v342
        %344 = vmatprep.mubr.f32.mxu0 0.0
        %345 = vmatmul.mubr.f32.gmra.mrb[0].mxu0 %v245
        %v346 = vpop.f32.mrb[0].mxu0
        %v347 = vadd.f32 %v214, %v346
        %v348 = vpop.f32.mrb[0].mxu0
        %v349 = vadd.f32 %v218, %v348
        %350 = vmatprep.mubr.f32.mxu0 0.0
        %351 = vmatmul.mubr.f32.gmra.mrb[0].mxu0 %v248
        %v352 = vpop.f32.mrb[0].mxu0
        %v353 = vadd.f32 %v214, %v352
        %v354 = vpop.f32.mrb[0].mxu0
        %v355 = vadd.f32 %v218, %v354
        %356 = vmatprep.mubr.f32.mxu0 0.0
        %357 = vmatmul.mubr.f32.gmra.mrb[0].mxu0 %v251
        %v358 = vpop.f32.mrb[0].mxu0
        %v359 = vadd.f32 %v214, %v358
        %v360 = vpop.f32.mrb[0].mxu0
        %v361 = vadd.f32 %v218, %v360
        %362 = vmatprep.mubr.f32.mxu0 0.0
        %363 = vmatmul.mubr.f32.gmra.mrb[0].mxu0 %v254
        %v364 = vpop.f32.mrb[0].mxu0
        %v365 = vadd.f32 %v214, %v364
        %v366 = vpop.f32.mrb[0].mxu0
        %v367 = vadd.f32 %v218, %v366
        %368 = vdwg.mxu0
        %369 = vmatprep.subr.mxu0 %v208
        %370 = vmatpush1.msra.mxu0 %v207
        %371 = vmatprep.subr.mxu0 0.0
        %372 = vmatpush1.msra.mxu0 0.0
        %373 = vmatprep.subr.mxu0 0.0
        %374 = vmatpush1.msra.mxu0 0.0
        %375 = vmatprep.subr.mxu0 0.0
        %376 = vmatpush1.msra.mxu0 0.0
        %377 = vmatprep.subr.mxu0 0.0
        %378 = vmatpush1.msra.mxu0 0.0
        %379 = vmatprep.subr.mxu0 0.0
        %380 = vmatpush1.msra.mxu0 0.0
        %381 = vmatprep.subr.mxu0 0.0
        %382 = vmatpush1.msra.mxu0 0.0
        %383 = vmatprep.subr.mxu0 0.0
        %384 = vmatpush1.msra.mxu0 0.0
        %385 = vmatprep.subr.mxu0 0.0
        %386 = vmatpush1.msra.mxu0 0.0
        %387 = vmatprep.subr.mxu0 0.0
        %388 = vmatpush1.msra.mxu0 0.0
        %389 = vmatprep.subr.mxu0 0.0
        %390 = vmatpush1.msra.mxu0 0.0
        %391 = vmatprep.subr.mxu0 0.0
        %392 = vmatpush1.msra.mxu0 0.0
        %393 = vmatprep.subr.mxu0 0.0
        %394 = vmatpush1.msra.mxu0 0.0
        %395 = vmatprep.subr.mxu0 0.0
        %396 = vmatpush1.msra.mxu0 0.0
        %397 = vmatprep.subr.mxu0 0.0
        %398 = vmatpush1.msra.mxu0 0.0
        %399 = vmatprep.subr.mxu0 0.0
        %400 = vmatpush1.msra.mxu0 0.0
        %401 = vmatprep.subr.mxu0 0.0
        %402 = vmatpush1.msra.mxu0 0.0
        %403 = vmatprep.subr.mxu0 0.0
        %404 = vmatpush1.msra.mxu0 0.0
        %405 = vmatprep.subr.mxu0 0.0
        %406 = vmatpush1.msra.mxu0 0.0
        %407 = vmatprep.subr.mxu0 0.0
        %408 = vmatpush1.msra.mxu0 0.0
        %409 = vmatprep.subr.mxu0 0.0
        %410 = vmatpush1.msra.mxu0 0.0
        %411 = vmatprep.subr.mxu0 0.0
        %412 = vmatpush1.msra.mxu0 0.0
        %413 = vmatprep.subr.mxu0 0.0
        %414 = vmatpush1.msra.mxu0 0.0
        %415 = vmatprep.subr.mxu0 0.0
        %416 = vmatpush1.msra.mxu0 0.0
        %417 = vmatprep.subr.mxu0 0.0
        %418 = vmatpush1.msra.mxu0 0.0
        %419 = vmatprep.subr.mxu0 0.0
        %420 = vmatpush1.msra.mxu0 0.0
        %421 = vmatprep.subr.mxu0 0.0
        %422 = vmatpush1.msra.mxu0 0.0
        %423 = vmatprep.subr.mxu0 0.0
        %424 = vmatpush1.msra.mxu0 0.0
        %425 = vmatprep.subr.mxu0 0.0
        %426 = vmatpush1.msra.mxu0 0.0
        %427 = vmatprep.subr.mxu0 0.0
        %428 = vmatpush1.msra.mxu0 0.0
        %429 = vmatprep.subr.mxu0 0.0
        %430 = vmatpush1.msra.mxu0 0.0
        %431 = vmatprep.subr.mxu0 0.0
        %432 = vmatpush1.msra.mxu0 0.0
        %433 = vmatprep.mubr.f32.mxu0 0.0
        %434 = vmatmul.mubr.f32.gmra.mrb[0].mxu0 %v233
        %v435 = vpop.f32.mrb[0].mxu0
        %v436 = vadd.f32 %v222, %v435
        %v437 = vpop.f32.mrb[0].mxu0
        %v438 = vadd.f32 %v226, %v437
        %439 = vmatprep.mubr.f32.mxu0 0.0
        %440 = vmatmul.mubr.f32.gmra.mrb[0].mxu0 %v236
        %v441 = vpop.f32.mrb[0].mxu0
        %v442 = vadd.f32 %v222, %v441
        %v443 = vpop.f32.mrb[0].mxu0
        %v444 = vadd.f32 %v226, %v443
        %445 = vmatprep.mubr.f32.mxu0 0.0
        %446 = vmatmul.mubr.f32.gmra.mrb[0].mxu0 %v239
        %v447 = vpop.f32.mrb[0].mxu0
        %v448 = vadd.f32 %v222, %v447
        %v449 = vpop.f32.mrb[0].mxu0
        %v450 = vadd.f32 %v226, %v449
        %451 = vmatprep.mubr.f32.mxu0 0.0
        %452 = vmatmul.mubr.f32.gmra.mrb[0].mxu0 %v242
        %v453 = vpop.f32.mrb[0].mxu0
        %v454 = vadd.f32 %v222, %v453
        %v455 = vpop.f32.mrb[0].mxu0
        %v456 = vadd.f32 %v226, %v455
        %457 = vmatprep.mubr.f32.mxu0 0.0
        %458 = vmatmul.mubr.f32.gmra.mrb[0].mxu0 %v245
        %v459 = vpop.f32.mrb[0].mxu0
        %v460 = vadd.f32 %v222, %v459
        %v461 = vpop.f32.mrb[0].mxu0
        %v462 = vadd.f32 %v226, %v461
        %463 = vmatprep.mubr.f32.mxu0 0.0
        %464 = vmatmul.mubr.f32.gmra.mrb[0].mxu0 %v248
        %v465 = vpop.f32.mrb[0].mxu0
        %v466 = vadd.f32 %v222, %v465
        %v467 = vpop.f32.mrb[0].mxu0
        %v468 = vadd.f32 %v226, %v467
        %469 = vmatprep.mubr.f32.mxu0 0.0
        %470 = vmatmul.mubr.f32.gmra.mrb[0].mxu0 %v251
        %v471 = vpop.f32.mrb[0].mxu0
        %v472 = vadd.f32 %v222, %v471
        %v473 = vpop.f32.mrb[0].mxu0
        %v474 = vadd.f32 %v226, %v473
        %475 = vmatprep.mubr.f32.mxu0 0.0
        %476 = vmatmul.mubr.f32.gmra.mrb[0].mxu0 %v254
        %v477 = vpop.f32.mrb[0].mxu0
        %v478 = vadd.f32 %v222, %v477
        %v479 = vpop.f32.mrb[0].mxu0
        %v480 = vadd.f32 %v226, %v479
        %481 = vdwg.mxu0
        %v482 = vmax.f32 %v323, 0.0
        %v483 = vmax.f32 %v325, 0.0
        %v484 = vmax.f32 %v436, 0.0
        %v485 = vmax.f32 %v438, 0.0
        %v486 = vmax.f32 %v329, 0.0
        %v487 = vmax.f32 %v331, 0.0
        %v488 = vmax.f32 %v442, 0.0
        %v489 = vmax.f32 %v444, 0.0
        %v490 = vmax.f32 %v335, 0.0
        %v491 = vmax.f32 %v337, 0.0
        %v492 = vmax.f32 %v448, 0.0
        %v493 = vmax.f32 %v450, 0.0
        %v494 = vmax.f32 %v341, 0.0
        %v495 = vmax.f32 %v343, 0.0
        %v496 = vmax.f32 %v454, 0.0
        %v497 = vmax.f32 %v456, 0.0
        %v498 = vmax.f32 %v347, 0.0
        %v499 = vmax.f32 %v349, 0.0
        %v500 = vmax.f32 %v460, 0.0
        %v501 = vmax.f32 %v462, 0.0
        %v502 = vmax.f32 %v353, 0.0
        %v503 = vmax.f32 %v355, 0.0
        %v504 = vmax.f32 %v466, 0.0
        %v505 = vmax.f32 %v468, 0.0
        %v506 = vmax.f32 %v359, 0.0
        %v507 = vmax.f32 %v361, 0.0
        %v508 = vmax.f32 %v472, 0.0
        %v509 = vmax.f32 %v474, 0.0
        %v510 = vmax.f32 %v365, 0.0
        %v511 = vmax.f32 %v367, 0.0
        %v512 = vmax.f32 %v478, 0.0
        %v513 = vmax.f32 %v480, 0.0
        %v514 = vadd.f32 %v482, %v486
        %v515 = vadd.f32 %v514, %v490
        %v516 = vadd.f32 %v515, %v494
        %v517 = vadd.f32 %v516, %v498
        %v518 = vadd.f32 %v517, %v502
        %v519 = vadd.f32 %v518, %v506
        %v520 = vadd.f32 %v519, %v510
        %v521 = vrot.slane %v520, 4
        %v522 = vadd.f32 %v520, %v521
        %v523 = vrot.slane %v522, 2
        %v524 = vadd.f32 %v522, %v523
        %v525 = vrot.slane %v524, 1
        %v526 = vadd.f32 %v524, %v525
        %v527 = vadd.f32 %v483, %v487
        %v528 = vadd.f32 %v527, %v491
        %v529 = vadd.f32 %v528, %v495
        %v530 = vadd.f32 %v529, %v499
        %v531 = vadd.f32 %v530, %v503
        %v532 = vadd.f32 %v531, %v507
        %v533 = vadd.f32 %v532, %v511
        %v534 = vrot.slane %v533, 4
        %v535 = vadd.f32 %v533, %v534
        %v536 = vrot.slane %v535, 2
        %v537 = vadd.f32 %v535, %v536
        %v538 = vrot.slane %v537, 1
        %v539 = vadd.f32 %v537, %v538
        %v540 = vadd.f32 %v484, %v488
        %v541 = vadd.f32 %v540, %v492
        %v542 = vadd.f32 %v541, %v496
        %v543 = vadd.f32 %v542, %v500
        %v544 = vadd.f32 %v543, %v504
        %v545 = vadd.f32 %v544, %v508
        %v546 = vadd.f32 %v545, %v512
        %v547 = vrot.slane %v546, 4
        %v548 = vadd.f32 %v546, %v547
        %v549 = vrot.slane %v548, 2
        %v550 = vadd.f32 %v548, %v549
        %v551 = vrot.slane %v550, 1
        %v552 = vadd.f32 %v550, %v551
        %v553 = vadd.f32 %v485, %v489
        %v554 = vadd.f32 %v553, %v493
        %v555 = vadd.f32 %v554, %v497
        %v556 = vadd.f32 %v555, %v501
        %v557 = vadd.f32 %v556, %v505
        %v558 = vadd.f32 %v557, %v509
        %v559 = vadd.f32 %v558, %v513
        %v560 = vrot.slane %v559, 4
        %v561 = vadd.f32 %v559, %v560
        %v562 = vrot.slane %v561, 2
        %v563 = vadd.f32 %v561, %v562
        %v564 = vrot.slane %v563, 1
        %v565 = vadd.f32 %v563, %v564
        %p566 = scmp.eq.s32.totalorder %s22, 0
        // Predicated region
        $region33: #{tpu_custom_call.1} parent=31 // pred_check
          %p567 = pneg %p566
        $region34: #{tpu_custom_call.1} parent=31 // pred_check_branch
          %569 = sbr.rel (%p567) target = $region36
        $region35: #{tpu_custom_call.1} parent=31 // pred_region
          %v574 = vcombine.low %v526, %v539
          %v575 = vcombine.low %v552, %v565
          %v577 = vunpack.c.l.s4 1966171168
          %v578 = vunpack.c.0.s8 %v577
          %v579 = vlaneseq
          %v580 = vshrl.u32 %v579, 7
          %v581 = vsub.s32 %v578, %v580
          %v582 = vrot.slane %v574, %v581
          %v584 = vunpack.c.l.s4 1966171168
          %v585 = vunpack.c.0.s8 %v584
          %v586 = vlaneseq
          %v587 = vshrl.u32 %v586, 7
          %v588 = vsub.s32 %v585, %v587
          %v589 = vrot.slane %v575, %v588
          %v590 = vcombine.low %v582, %v589
          %v592 = vunpack.c.l.s4 1966171168
          %v593 = vunpack.c.0.s8 %v592
          %v594 = vlaneseq
          %v595 = vshrl.u32 %v594, 7
          %v596 = vsub.s32 %v593, %v595
          %v597 = vrot.slane %v590, %v596
          %v599 = vlaneseq
          %vm600 = vcmp.ge.s32.totalorder %v599, 0
          %vm601 = vcmp.lt.s32.totalorder %v599, 512
          %vm602 = vmand %vm600, %vm601
          %603 = vst.msk [vmem:[%s186] sm:$0xf] %vm602, %v597
        $region36: #{tpu_custom_call.1} parent=31 // pred_fallthru
          _
        %p604 = scmp.gt.s32.totalorder %s22, 0
        // Predicated region
        $region37: #{tpu_custom_call.1} parent=31 // pred_check
          %p605 = pneg %p604
        $region38: #{tpu_custom_call.1} parent=31 // pred_check_branch
          %607 = sbr.rel (%p605) target = $region40
        $region39: #{tpu_custom_call.1} parent=31 // pred_region
          %v608 = vld [vmem:[%s186] sm:$0xf]
          %v613 = vcombine.low %v526, %v539
          %v614 = vcombine.low %v552, %v565
          %v616 = vunpack.c.l.s4 1966171168
          %v617 = vunpack.c.0.s8 %v616
          %v618 = vlaneseq
          %v619 = vshrl.u32 %v618, 7
          %v620 = vsub.s32 %v617, %v619
          %v621 = vrot.slane %v613, %v620
          %v623 = vunpack.c.l.s4 1966171168
          %v624 = vunpack.c.0.s8 %v623
          %v625 = vlaneseq
          %v626 = vshrl.u32 %v625, 7
          %v627 = vsub.s32 %v624, %v626
          %v628 = vrot.slane %v614, %v627
          %v629 = vcombine.low %v621, %v628
          %v631 = vunpack.c.l.s4 1966171168
          %v632 = vunpack.c.0.s8 %v631
          %v633 = vlaneseq
          %v634 = vshrl.u32 %v633, 7
          %v635 = vsub.s32 %v632, %v634
          %v636 = vrot.slane %v629, %v635
          %v638 = vadd.f32 %v608, %v636
          %v639 = vlaneseq
          %vm640 = vcmp.ge.s32.totalorder %v639, 0
          %vm641 = vcmp.lt.s32.totalorder %v639, 512
          %vm642 = vmand %vm640, %vm641
          %643 = vst.msk [vmem:[%s186] sm:$0xf] %vm642, %v638
        $region40: #{tpu_custom_call.1} parent=31 // pred_fallthru
          _
        %p644 = scmp.eq.s32.totalorder %s22, 3
        // Predicated region
        $region41: #{tpu_custom_call.1} parent=31 // pred_check
          %p645 = pneg %p644
        $region42: #{tpu_custom_call.1} parent=31 // pred_check_branch
          %647 = sbr.rel (%p645) target = $region44
        $region43: #{tpu_custom_call.1} parent=31 // pred_region
          %v648 = vld [vmem:[%s186] sm:$0xf]
          %v649 = vmul.f32 %v648, 0.00390625
          %v650 = vlaneseq
          %vm651 = vcmp.ge.s32.totalorder %v650, 0
          %vm652 = vcmp.lt.s32.totalorder %v650, 512
          %vm653 = vmand %vm651, %vm652
          %654 = vst.msk [vmem:[%s186] sm:$0xf] %vm653, %v649
        $region44: #{tpu_custom_call.1} parent=31 // pred_fallthru
          _
        %s655 = sand.u32 %s107, 1
        %s656 = scalar_lea.sflag [#allocation3], %s655
        %s657 = sand.u32 %s107, 1
        %s658 = smul.addr %s657, 4
        %s659 = scalar_lea.vmem [#allocation2], %s658
        // Predicated region
        $region45: #{tpu_custom_call.1} parent=31 // pred_check
          %p660 = pneg %p117
        $region46: #{tpu_custom_call.1} parent=31 // pred_check_branch
          %662 = sbr.rel (%p660) target = $region48
        $region47: #{tpu_custom_call.1} parent=31 // pred_region
          %s664 = ssub.s32 64, 64
          %665 = vsyncadd %s656, %s664
          %s666 = smul.addr %s21, 4
          %s667 = smul.addr %s666, 16
          %s668 = scalar_lea.hbm %s3, %s667
          %s670 = sshll.u32 %s659, 4
          %s671 = int_to_ptr.vmem [resolvable:$true] %s670
          %673 = dma.vmem_to_hbm [thread:$0]  %s671, 64, %s668, %s656
        $region48: #{tpu_custom_call.1} parent=31 // pred_fallthru
          _
      $region32: #{tpu_custom_call.1} parent=5 // pred_fallthru
        _
      %p674 = scmp.le.s32.totalorder 2, %s12
      // Predicated region
      $region49: #{tpu_custom_call.1} parent=5 // pred_check
        %p675 = pneg %p674
      $region50: #{tpu_custom_call.1} parent=5 // pred_check_branch
        %677 = sbr.rel (%p675) target = $region52
      $region51: #{tpu_custom_call.1} parent=5 // pred_region
        %s678 = ssub.s32 %s12, 2
        // Predicated region
        $region53: #{tpu_custom_call.1} parent=51 // pred_check
          %p679 = pneg %p123
        $region54: #{tpu_custom_call.1} parent=51 // pred_check_branch
          %681 = sbr.rel (%p679) target = $region56
        $region55: #{tpu_custom_call.1} parent=51 // pred_region
          %s682 = sand.u32 %s108, 1
          %s683 = scalar_lea.sflag [#allocation3], %s682
          %s684 = sand.u32 %s108, 1
          %s685 = smul.addr %s684, 4
          %s686 = scalar_lea.vmem [#allocation2], %s685
          %687 = dma.done %s683, 64
        $region56: #{tpu_custom_call.1} parent=51 // pred_fallthru
          _
      $region52: #{tpu_custom_call.1} parent=5 // pred_fallthru
        _
    $region6: #{tpu_custom_call.1} parent=1 // loop_footer
      %s16 = sadd.s32 1, %s12
    $region7: #{tpu_custom_call.1} parent=1 // loop_footer_branch
      %11 = sbr.rel target = $region3
    $region8: #{tpu_custom_call.1} parent=1 // loop_exit
      _
    %688 = vsyncpa [#allocation3], 1
    %s689 = scalar_lea.sflag [#allocation3], 1
    %690 = vsyncpa %s689, 1

</llo_original>
